<compile_context>
chip_gen: v5e
topology: v5e:2x2
jax: 0.10.0
libtpu: 0.0.40
codegen_flags: <defaults>
</compile_context>

<pallas_src>
import jax
import jax.numpy as jnp
from jax.experimental import pallas as pl
from jax.experimental.pallas import tpu as pltpu


def _round_up(x, m):
    return (x + m - 1) // m * m


def _make_mlp_kernel(bf16_act):
    def _mlp_kernel(x_ref, w1_ref, b1_ref, w2_ref, b2_ref, o_ref):
        # Channels-on-sublane / tokens-on-lane layout:
        #   x_ref:  (nb, Cin,  T)   input tile, native dtype (e.g. f32)
        #   w1_ref: (Chp, Cin)      fc1 weight (bf16, resident)
        #   b1_ref: (Chp, 1)        fc1 bias   (f32)
        #   w2_ref: (Cout, Chp)     fc2 weight (bf16, resident)
        #   b2_ref: (Cout, 1)       fc2 bias   (f32)
        #   o_ref:  (nb, Cout, T)   lane-dense output tile
        w1 = w1_ref[...]
        b1 = b1_ref[...]
        w2 = w2_ref[...]
        b2 = b2_ref[...]
        for b in range(x_ref.shape[0]):                 # nb is small & static
            x = x_ref[b].astype(w1.dtype)               # in-kernel cast to bf16
            h = jnp.dot(w1, x, preferred_element_type=jnp.float32)   # (Chp, T)
            h = h + b1                                  # bias add in f32
            if bf16_act:
                # v6e / v7x: bf16 VPU -> clip in bf16 (halves vreg traffic)
                h = jnp.clip(h.astype(w2.dtype), 0.0, 6.0)
            else:
                # v5e and older: f32 epilogue, cast only for the MXU feed
                h = jnp.clip(h, 0.0, 6.0).astype(w2.dtype)
            # Dropout(p=0.0) is an identity -> no-op.
            o = jnp.dot(w2, h, preferred_element_type=jnp.float32)   # (Cout, T)
            o = o + b2
            o_ref[b] = o.astype(o_ref.dtype)
    return _mlp_kernel


def mlp_pallas(x_nchw, w1, b1, w2, b2, *, tile_hw=2048, compute_dtype=jnp.bfloat16):
    """x_nchw: (N, Cin, H, W); w1: (Ch, Cin, 1, 1); b1: (Ch,); w2: (Cout, Ch, 1, 1); b2: (Cout,)."""
    N, Cin, H, W = x_nchw.shape
    Ch = w1.shape[0]
    Cout = w2.shape[0]
    HW = H * W

    # Tokens-on-lane layout straight from NCHW (free reshape, NO dtype cast here).
    x_tok = x_nchw.reshape(N, Cin, HW)

    # ---- weights: pad hidden dim to a sublane multiple (zero rows/cols are inert) ----
    cd_bytes = jnp.dtype(compute_dtype).itemsize
    sub = 16 if cd_bytes == 2 else 8
    Ch_pad = _round_up(Ch, sub)
    w1_mat = jnp.pad(w1.reshape(Ch, Cin).astype(compute_dtype),
                     ((0, Ch_pad - Ch), (0, 0)))               # (Chp, Cin)
    w2_mat = jnp.pad(w2.reshape(Cout, Ch).astype(compute_dtype),
                     ((0, 0), (0, Ch_pad - Ch)))               # (Cout, Chp)
    b1_col = jnp.pad(b1.astype(jnp.float32).reshape(Ch, 1),
                     ((0, Ch_pad - Ch), (0, 0)))               # (Chp, 1)
    b2_col = b2.reshape(Cout, 1).astype(jnp.float32)           # (Cout, 1)

    # ---- generation-aware VMEM budget & tile sizing ----
    x_bytes = jnp.dtype(x_nchw.dtype).itemsize
    out_bytes = x_bytes
    try:
        vmem_phys = int(pltpu.get_tpu_info().vmem_capacity_bytes)
    except Exception:  # pragma: no cover - conservative fallback (fits v7x too)
        vmem_phys = 64 * 1024 * 1024
    budget = int(vmem_phys * 0.7)

    weight_bytes = (2 * (Ch_pad * Cin + Cout * Ch_pad) * cd_bytes
                    + 2 * (Ch_pad + Cout) * 4)
    per_tok = (2 * Cin * x_bytes            # double-buffered input tile (native dtype)
               + 2 * Cout * out_bytes       # double-buffered output tile
               + Cin * cd_bytes             # in-kernel bf16 copy of x
               + Ch_pad * (4 + cd_bytes)    # f32 intermediate + bf16 copy
               + Cout * 4)                  # f32 pre-cast result

    max_tokens = max(128, (budget - weight_bytes) // max(per_tok, 1))
    tile_target = max(128, (min(tile_hw, max_tokens) // 128) * 128)

    HW128 = _round_up(HW, 128)              # pad spatial only at lane granularity
    tile_target = min(tile_target, HW128)

    def pick_tile(target):
        # choose tile (multiple of 128) minimizing padded tokens + per-step overhead
        best = None
        for t in range(128, target + 1, 128):
            padded = _round_up(HW128, t)
            cost = padded + (padded // t) * 64   # 64-token proxy for ~0.35us/step
            if best is None or cost <= best[0]:
                best = (cost, t, padded)
        return best[1], best[2]

    tile, HW_pad = pick_tile(tile_target)

    # v7x has 2 TensorCores: make sure there are >=2 parallel grid steps when N==1.
    if N == 1 and HW_pad // tile < 2 and tile > 128:
        tile, HW_pad = pick_tile(max(128, ((tile // 2) // 128) * 128))

    # Group batch images per step when the spatial extent is tiny.
    n_tok = HW_pad // tile
    nb = 1
    if N > 1 and HW_pad <= 1024:
        for cand in (8, 4, 2):
            if (cand <= N and N % cand == 0 and (N // cand) * n_tok >= 2
                    and cand * per_tok * tile + weight_bytes <= budget):
                nb = cand
                break

    if HW_pad != HW:  # ragged spatial extent: zero-pad, slice the result back.
        x_tok = jnp.pad(x_tok, ((0, 0), (0, 0), (0, HW_pad - HW)))

    est = nb * per_tok * tile + weight_bytes
    vmem_limit = int(max(32 * 1024 * 1024, min(budget, 2 * est)))

    # bf16 epilogue only on chips with a bf16 VPU (v6e / v7x); f32 elsewhere.
    try:
        kind = jax.devices()[0].device_kind.lower()
    except Exception:  # pragma: no cover
        kind = ""
    bf16_act = ("v6" in kind) or ("v7" in kind) or ("7x" in kind)

    grid = (N // nb, HW_pad // tile)

    out_tok = pl.pallas_call(
        _make_mlp_kernel(bf16_act),
        out_shape=jax.ShapeDtypeStruct((N, Cout, HW_pad), x_nchw.dtype),
        grid_spec=pltpu.PrefetchScalarGridSpec(
            num_scalar_prefetch=0,
            grid=grid,
            in_specs=[
                pl.BlockSpec((nb, Cin, tile), lambda n, t: (n, 0, t)),
                pl.BlockSpec((Ch_pad, Cin), lambda n, t: (0, 0)),
                pl.BlockSpec((Ch_pad, 1), lambda n, t: (0, 0)),
                pl.BlockSpec((Cout, Ch_pad), lambda n, t: (0, 0)),
                pl.BlockSpec((Cout, 1), lambda n, t: (0, 0)),
            ],
            out_specs=pl.BlockSpec((nb, Cout, tile), lambda n, t: (n, 0, t)),
        ),
        compiler_params=pltpu.CompilerParams(
            dimension_semantics=("parallel", "parallel"),
            vmem_limit_bytes=vmem_limit,
        ),
    )(x_tok, w1_mat, b1_col, w2_mat, b2_col)

    if HW_pad != HW:
        out_tok = out_tok[:, :, :HW]
    return out_tok.reshape(N, Cout, H, W)


def mlp_ref(x_nchw, w1, b1, w2, b2):
    """Pure-JAX f32 reference matching the PyTorch module (eval / drop=0.0)."""
    Ch, Cout = w1.shape[0], w2.shape[0]
    Cin = x_nchw.shape[1]
    h = jnp.einsum('oc,nchw->nohw', w1.reshape(Ch, Cin), x_nchw) + b1[None, :, None, None]
    h = jnp.clip(h, 0.0, 6.0)
    o = jnp.einsum('oc,nchw->nohw', w2.reshape(Cout, Ch), h) + b2[None, :, None, None]
    return o


if __name__ == "__main__":
    # Small shapes consistent with the module: NCHW input, hidden expansion.
    N, Cin, H, W = 2, 4, 16, 16
    hidden = 32
    out_features = Cin  # out_features defaults to in_features

    key = jax.random.PRNGKey(0)
    k_x, k_w1, k_b1, k_w2, k_b2 = jax.random.split(key, 5)

    x = jax.random.normal(k_x, (N, Cin, H, W), dtype=jnp.float32)
    # Deterministic synthetic parameters (shapes follow nn.Conv2d(..., 1, 1, 0)).
    w1 = 0.1 * jax.random.normal(k_w1, (hidden, Cin, 1, 1), dtype=jnp.float32)
    b1 = 0.1 * jax.random.normal(k_b1, (hidden,), dtype=jnp.float32)
    w2 = 0.1 * jax.random.normal(k_w2, (out_features, hidden, 1, 1), dtype=jnp.float32)
    b2 = 0.1 * jax.random.normal(k_b2, (out_features,), dtype=jnp.float32)

    out = mlp_pallas(x, w1, b1, w2, b2)
    out = jax.block_until_ready(out)

    ref = mlp_ref(x, w1, b1, w2, b2)
    assert out.shape == (N, out_features, H, W)
    # bf16 MXU inputs (f32 accumulate / f32 bias adds) -> loosened tolerance.
    assert jnp.allclose(out, ref, atol=3e-2, rtol=3e-2), "mismatch vs reference"

    print("KERNEL_OK")
</pallas_src>

<mosaic_0001>
module attributes {stable_mosaic.version = 11 : i64} {
  func.func @_mlp_kernel(%arg0: i32, %arg1: i32, %arg2: memref<1x4x256xf32, #tpu.memory_space<vmem>>, %arg3: memref<32x4xbf16, #tpu.memory_space<vmem>>, %arg4: memref<32x1xf32, #tpu.memory_space<vmem>>, %arg5: memref<4x32xbf16, #tpu.memory_space<vmem>>, %arg6: memref<4x1xf32, #tpu.memory_space<vmem>>, %arg7: memref<1x4x256xf32, #tpu.memory_space<vmem>>) attributes {dimension_semantics = [#tpu.dimension_semantics<parallel>, #tpu.dimension_semantics<parallel>], iteration_bounds = array<i64: 2, 1>, scalar_prefetch = 0 : i64, scratch_operands = 0 : i64, tpu.core_type = #tpu.core_type<tc>, window_params = [{transform_indices = @transform_0, window_bounds = array<i64: 1, 4, 256>}, {pipeline_mode = #tpu.pipeline_mode<synchronous>, transform_indices = @transform_1, window_bounds = array<i64: 32, 4>}, {pipeline_mode = #tpu.pipeline_mode<synchronous>, transform_indices = @transform_2, window_bounds = array<i64: 32, 1>}, {pipeline_mode = #tpu.pipeline_mode<synchronous>, transform_indices = @transform_3, window_bounds = array<i64: 4, 32>}, {pipeline_mode = #tpu.pipeline_mode<synchronous>, transform_indices = @transform_4, window_bounds = array<i64: 4, 1>}, {transform_indices = @transform_5, window_bounds = array<i64: 1, 4, 256>}]} {
    %c0 = arith.constant 0 : index
    %c0_0 = arith.constant 0 : index
    %0 = vector.load %arg3[%c0, %c0_0] : memref<32x4xbf16, #tpu.memory_space<vmem>>, vector<32x4xbf16>
    %c0_1 = arith.constant 0 : index
    %c0_2 = arith.constant 0 : index
    %1 = vector.load %arg4[%c0_1, %c0_2] : memref<32x1xf32, #tpu.memory_space<vmem>>, vector<32x1xf32>
    %c0_3 = arith.constant 0 : index
    %c0_4 = arith.constant 0 : index
    %2 = vector.load %arg5[%c0_3, %c0_4] : memref<4x32xbf16, #tpu.memory_space<vmem>>, vector<4x32xbf16>
    %c0_5 = arith.constant 0 : index
    %c0_6 = arith.constant 0 : index
    %3 = vector.load %arg6[%c0_5, %c0_6] : memref<4x1xf32, #tpu.memory_space<vmem>>, vector<4x1xf32>
    %c0_7 = arith.constant 0 : index
    %c0_8 = arith.constant 0 : index
    %c0_9 = arith.constant 0 : index
    %4 = vector.load %arg2[%c0_7, %c0_8, %c0_9] : memref<1x4x256xf32, #tpu.memory_space<vmem>>, vector<1x4x256xf32>
    %5 = vector.shape_cast %4 : vector<1x4x256xf32> to vector<4x256xf32>
    %6 = arith.truncf %5 : vector<4x256xf32> to vector<4x256xbf16>
    %cst = arith.constant dense<0.000000e+00> : vector<32x256xf32>
    %7 = tpu.matmul %0, %6, %cst {dimension_numbers = #tpu.dot_dimension_numbers<[1], [0], [0], [1], [0, 0, 1, 1], [], []>} : vector<32x4xbf16>, vector<4x256xbf16>, vector<32x256xf32> -> vector<32x256xf32>
    %8 = vector.broadcast %1 : vector<32x1xf32> to vector<32x256xf32>
    %9 = arith.addf %7, %8 : vector<32x256xf32>
    %cst_10 = arith.constant 0.000000e+00 : f32
    %cst_11 = arith.constant 6.000000e+00 : f32
    %10 = vector.broadcast %cst_10 : f32 to vector<32x256xf32>
    %11 = arith.maximumf %10, %9 : vector<32x256xf32>
    %12 = vector.broadcast %cst_11 : f32 to vector<32x256xf32>
    %13 = arith.minimumf %12, %11 : vector<32x256xf32>
    %14 = arith.truncf %13 : vector<32x256xf32> to vector<32x256xbf16>
    %cst_12 = arith.constant dense<0.000000e+00> : vector<4x256xf32>
    %15 = tpu.matmul %2, %14, %cst_12 {dimension_numbers = #tpu.dot_dimension_numbers<[1], [0], [0], [1], [0, 0, 1, 1], [], []>} : vector<4x32xbf16>, vector<32x256xbf16>, vector<4x256xf32> -> vector<4x256xf32>
    %16 = vector.broadcast %3 : vector<4x1xf32> to vector<4x256xf32>
    %17 = arith.addf %15, %16 : vector<4x256xf32>
    %c0_13 = arith.constant 0 : index
    %c0_14 = arith.constant 0 : index
    %c0_15 = arith.constant 0 : index
    %18 = vector.load %arg7[%c0_13, %c0_14, %c0_15] : memref<1x4x256xf32, #tpu.memory_space<vmem>>, vector<1x4x256xf32>
    %19 = vector.shape_cast %18 : vector<1x4x256xf32> to vector<4x256xf32>
    %20 = vector.shape_cast %17 : vector<4x256xf32> to vector<1x4x256xf32>
    tpu.vector_store %arg7[%c0_13, %c0_14, %c0_15], %20 {strides = array<i32>} : memref<1x4x256xf32, #tpu.memory_space<vmem>>, vector<1x4x256xf32>,
    return
  }
  func.func @transform_0(%arg0: i32, %arg1: i32) -> (i32, i32, i32) {
    %c0_i32 = arith.constant 0 : i32
    %c0_i32_0 = arith.constant 0 : i32
    return %arg0, %c0_i32, %arg1 : i32, i32, i32
  }
  func.func @transform_1(%arg0: i32, %arg1: i32) -> (i32, i32) {
    %c0_i32 = arith.constant 0 : i32
    %c0_i32_0 = arith.constant 0 : i32
    %c0_i32_1 = arith.constant 0 : i32
    return %c0_i32, %c0_i32_0 : i32, i32
  }
  func.func @transform_2(%arg0: i32, %arg1: i32) -> (i32, i32) {
    %c0_i32 = arith.constant 0 : i32
    %c0_i32_0 = arith.constant 0 : i32
    %c0_i32_1 = arith.constant 0 : i32
    return %c0_i32, %c0_i32_0 : i32, i32
  }
  func.func @transform_3(%arg0: i32, %arg1: i32) -> (i32, i32) {
    %c0_i32 = arith.constant 0 : i32
    %c0_i32_0 = arith.constant 0 : i32
    %c0_i32_1 = arith.constant 0 : i32
    return %c0_i32, %c0_i32_0 : i32, i32
  }
  func.func @transform_4(%arg0: i32, %arg1: i32) -> (i32, i32) {
    %c0_i32 = arith.constant 0 : i32
    %c0_i32_0 = arith.constant 0 : i32
    %c0_i32_1 = arith.constant 0 : i32
    return %c0_i32, %c0_i32_0 : i32, i32
  }
  func.func @transform_5(%arg0: i32, %arg1: i32) -> (i32, i32, i32) {
    %c0_i32 = arith.constant 0 : i32
    %c0_i32_0 = arith.constant 0 : i32
    return %arg0, %c0_i32, %arg1 : i32, i32, i32
  }
}

</mosaic_0001>

<llo_original>
// kernel: tpu_custom_call.1
$region0: #{tpu_custom_call.1}
  #allocation0 [shape = 'u32[]', space=smem, size = 0x4, offset = 0x4, fixed_abs, tag = 'smem constant byte address 0x4 - core index']
  #allocation1 [shape = 'u32[72,128]{1,0:T(1,128)}', space=vmem, size = 0x9000, scoped, tag = 'internal scratch']
  %s0 = inlined_call_operand.vmem [shape: f32[2,4,256], index: 0, kind: input, shape index: {}]
  %s1 = inlined_call_operand.vmem [shape: bf16[32,4], index: 1, kind: input, shape index: {}]
  %s2 = inlined_call_operand.vmem [shape: f32[32,1], index: 2, kind: input, shape index: {}]
  %s3 = inlined_call_operand.vmem [shape: bf16[4,32], index: 3, kind: input, shape index: {}]
  %s4 = inlined_call_operand.vmem [shape: f32[4,1], index: 4, kind: input, shape index: {}]
  %s5 = inlined_call_operand.hbm [shape: f32[2,4,256], index: 5, kind: output, shape index: {}]
  %s6 = sld [smem:[#allocation0]]
  $region53: #{tpu_custom_call.1} parent=0
    _
  %s8 = ssub.s32 1, %s6
  %s9 = scalar_select 0, %s8, %s6
  $region1: #{tpu_custom_call.1} parent=0
    #allocation2 [shape = 'u8[8192]{0}', space=vmem, size = 0x2000, scoped, tag = 'output window, operand 0']
    #allocation3 [shape = 's32[2]{0}', space=sflag, size = 0x8, scoped, tag = 'scoped memory for tpu_custom_call.1']
    %10 = vsyncpa [#allocation3], 0
    %s11 = scalar_lea.sflag [#allocation3], 1
    %12 = vsyncpa %s11, 0
    loop: start=0, step=1, limit=4
    $region2: #{tpu_custom_call.1} parent=1 // loop_pre_header
      _
    $region3: #{tpu_custom_call.1} parent=1 // loop_header
      %s14 = sphi 0, %s18
      %p15 = scmp.ge.s32.totalorder %s14, 4
      %s21 = sphi 0, %s33
      %s22 = sphi 0, %s29
      %s23 = sphi 0, %s21
      %s24 = sphi 0, %s22
      %s25 = sphi 0, %s23
      %s26 = sphi 0, %s24
      %s38 = sphi 0, %s40
      %s41 = sphi 0, %s38
      %s42 = sphi 0, %s41
      %s58 = sphi 0, %s42
      %s62 = sphi 0, %s62
      %s64 = sphi 0, %s62
      %s65 = sphi 0, %s64
      %s79 = sphi 0, %s65
      %s83 = sphi 0, %s83
      %s85 = sphi 0, %s83
      %s86 = sphi 0, %s85
      %s100 = sphi 0, %s86
      %s104 = sphi 0, %s104
      %s106 = sphi 0, %s104
      %s107 = sphi 0, %s106
      %s121 = sphi 0, %s107
      %s125 = sphi 0, %s125
      %s127 = sphi 0, %s125
      %s128 = sphi 0, %s127
      %s142 = sphi 0, %s128
      %s150 = sphi 0, %s152
      %s153 = sphi 0, %s150
      %s154 = sphi 0, %s153
      %s170 = sphi 0, %s154
    $region4: #{tpu_custom_call.1} parent=1 // loop_header_branch
      %17 = sbr.rel (%p15) target = $region8
    $region5: #{tpu_custom_call.1} parent=1 // loop_body
      %s19 = ssub.s32 %s14, 1
      %s20 = ssub.s32 %s14, 2
      %s27 = sadd.s32 1, %s22
      %p28 = scmp.ge.s32.totalorder %s27, 1
      %s29 = scalar_select %p28, 0, %s27
      %s30 = sadd.s32 1, %s21
      %s31 = scalar_select %p28, %s30, %s21
      %p32 = scmp.ge.s32.totalorder %s31, 2
      %s33 = scalar_select %p32, 0, %s31
      %s34 = ssub.s32 %s21, %s33
      %s35 = ssub.s32 %s22, %s29
      %s36 = sor.u32 %s34, %s35
      %p37 = scmp.eq.s32.totalorder %s36, 0
      %s39 = sadd.s32 %s38, 1
      %s40 = scalar_select %p37, %s38, %s39
      %p43 = pneg %p37
      %p44 = scmp.eq.s32.totalorder %s14, 1
      %p45 = por %p43, %p44
      %p46 = scmp.ne.s32.totalorder %s38, %s41
      %p47 = scmp.eq.s32.totalorder %s14, 0
      %p48 = por %p46, %p47
      %p49 = scmp.ne.s32.totalorder %s38, %s41
      %p50 = scmp.eq.s32.totalorder %s19, 1
      %p51 = por %p49, %p50
      %p52 = scmp.ne.s32.totalorder %s41, %s42
      %p53 = scmp.eq.s32.totalorder %s19, 0
      %p54 = por %p52, %p53
      %p55 = scmp.ne.s32.totalorder %s41, %s42
      %p56 = scmp.eq.s32.totalorder %s20, 1
      %p57 = por %p55, %p56
      %p59 = scmp.ne.s32.totalorder %s42, %s58
      %p60 = scmp.eq.s32.totalorder %s20, 0
      %p61 = por %p59, %p60
      %s63 = sadd.s32 %s62, 1
      %p66 = scmp.eq.s32.totalorder %s14, 1
      %p67 = scmp.ne.s32.totalorder %s62, %s64
      %p68 = scmp.eq.s32.totalorder %s14, 0
      %p69 = por %p67, %p68
      %p70 = scmp.ne.s32.totalorder %s62, %s64
      %p71 = scmp.eq.s32.totalorder %s19, 1
      %p72 = por %p70, %p71
      %p73 = scmp.ne.s32.totalorder %s64, %s65
      %p74 = scmp.eq.s32.totalorder %s19, 0
      %p75 = por %p73, %p74
      %p76 = scmp.ne.s32.totalorder %s64, %s65
      %p77 = scmp.eq.s32.totalorder %s20, 1
      %p78 = por %p76, %p77
      %p80 = scmp.ne.s32.totalorder %s65, %s79
      %p81 = scmp.eq.s32.totalorder %s20, 0
      %p82 = por %p80, %p81
      %s84 = sadd.s32 %s83, 1
      %p87 = scmp.eq.s32.totalorder %s14, 1
      %p88 = scmp.ne.s32.totalorder %s83, %s85
      %p89 = scmp.eq.s32.totalorder %s14, 0
      %p90 = por %p88, %p89
      %p91 = scmp.ne.s32.totalorder %s83, %s85
      %p92 = scmp.eq.s32.totalorder %s19, 1
      %p93 = por %p91, %p92
      %p94 = scmp.ne.s32.totalorder %s85, %s86
      %p95 = scmp.eq.s32.totalorder %s19, 0
      %p96 = por %p94, %p95
      %p97 = scmp.ne.s32.totalorder %s85, %s86
      %p98 = scmp.eq.s32.totalorder %s20, 1
      %p99 = por %p97, %p98
      %p101 = scmp.ne.s32.totalorder %s86, %s100
      %p102 = scmp.eq.s32.totalorder %s20, 0
      %p103 = por %p101, %p102
      %s105 = sadd.s32 %s104, 1
      %p108 = scmp.eq.s32.totalorder %s14, 1
      %p109 = scmp.ne.s32.totalorder %s104, %s106
      %p110 = scmp.eq.s32.totalorder %s14, 0
      %p111 = por %p109, %p110
      %p112 = scmp.ne.s32.totalorder %s104, %s106
      %p113 = scmp.eq.s32.totalorder %s19, 1
      %p114 = por %p112, %p113
      %p115 = scmp.ne.s32.totalorder %s106, %s107
      %p116 = scmp.eq.s32.totalorder %s19, 0
      %p117 = por %p115, %p116
      %p118 = scmp.ne.s32.totalorder %s106, %s107
      %p119 = scmp.eq.s32.totalorder %s20, 1
      %p120 = por %p118, %p119
      %p122 = scmp.ne.s32.totalorder %s107, %s121
      %p123 = scmp.eq.s32.totalorder %s20, 0
      %p124 = por %p122, %p123
      %s126 = sadd.s32 %s125, 1
      %p129 = scmp.eq.s32.totalorder %s14, 1
      %p130 = scmp.ne.s32.totalorder %s125, %s127
      %p131 = scmp.eq.s32.totalorder %s14, 0
      %p132 = por %p130, %p131
      %p133 = scmp.ne.s32.totalorder %s125, %s127
      %p134 = scmp.eq.s32.totalorder %s19, 1
      %p135 = por %p133, %p134
      %p136 = scmp.ne.s32.totalorder %s127, %s128
      %p137 = scmp.eq.s32.totalorder %s19, 0
      %p138 = por %p136, %p137
      %p139 = scmp.ne.s32.totalorder %s127, %s128
      %p140 = scmp.eq.s32.totalorder %s20, 1
      %p141 = por %p139, %p140
      %p143 = scmp.ne.s32.totalorder %s128, %s142
      %p144 = scmp.eq.s32.totalorder %s20, 0
      %p145 = por %p143, %p144
      %s146 = ssub.s32 %s21, %s33
      %s147 = ssub.s32 %s22, %s29
      %s148 = sor.u32 %s146, %s147
      %p149 = scmp.eq.s32.totalorder %s148, 0
      %s151 = sadd.s32 %s150, 1
      %s152 = scalar_select %p149, %s150, %s151
      %p155 = pneg %p149
      %p156 = scmp.eq.s32.totalorder %s14, 1
      %p157 = por %p155, %p156
      %p158 = scmp.ne.s32.totalorder %s150, %s153
      %p159 = scmp.eq.s32.totalorder %s14, 0
      %p160 = por %p158, %p159
      %p161 = scmp.ne.s32.totalorder %s150, %s153
      %p162 = scmp.eq.s32.totalorder %s19, 1
      %p163 = por %p161, %p162
      %p164 = scmp.ne.s32.totalorder %s153, %s154
      %p165 = scmp.eq.s32.totalorder %s19, 0
      %p166 = por %p164, %p165
      %p167 = scmp.ne.s32.totalorder %s153, %s154
      %p168 = scmp.eq.s32.totalorder %s20, 1
      %p169 = por %p167, %p168
      %p171 = scmp.ne.s32.totalorder %s154, %s170
      %p172 = scmp.eq.s32.totalorder %s20, 0
      %p173 = por %p171, %p172
      %p174 = scmp.le.s32.totalorder 1, %s14
      %p175 = scmp.lt.s32.totalorder %s14, 3
      %p176 = pnand %p174, %p175
      %p177 = pneg %p176
      // Predicated region
      $region9: #{tpu_custom_call.1} parent=5 // pred_check
        _
      $region10: #{tpu_custom_call.1} parent=5 // pred_check_branch
        %179 = sbr.rel (%p176) target = $region12
      $region11: #{tpu_custom_call.1} parent=5 // pred_region
        %s180 = ssub.s32 %s14, 1
        // Predicated region
        $region13: #{tpu_custom_call.1} parent=11 // pred_check
          %p181 = pneg %p75
        $region14: #{tpu_custom_call.1} parent=11 // pred_check_branch
          %183 = sbr.rel (%p181) target = $region16
        $region15: #{tpu_custom_call.1} parent=11 // pred_region
          _
        $region16: #{tpu_custom_call.1} parent=11 // pred_fallthru
          _
        // Predicated region
        $region17: #{tpu_custom_call.1} parent=11 // pred_check
          %p184 = pneg %p96
        $region18: #{tpu_custom_call.1} parent=11 // pred_check_branch
          %186 = sbr.rel (%p184) target = $region20
        $region19: #{tpu_custom_call.1} parent=11 // pred_region
          _
        $region20: #{tpu_custom_call.1} parent=11 // pred_fallthru
          _
        // Predicated region
        $region21: #{tpu_custom_call.1} parent=11 // pred_check
          %p187 = pneg %p117
        $region22: #{tpu_custom_call.1} parent=11 // pred_check_branch
          %189 = sbr.rel (%p187) target = $region24
        $region23: #{tpu_custom_call.1} parent=11 // pred_region
          _
        $region24: #{tpu_custom_call.1} parent=11 // pred_fallthru
          _
        // Predicated region
        $region25: #{tpu_custom_call.1} parent=11 // pred_check
          %p190 = pneg %p138
        $region26: #{tpu_custom_call.1} parent=11 // pred_check_branch
          %192 = sbr.rel (%p190) target = $region28
        $region27: #{tpu_custom_call.1} parent=11 // pred_region
          _
        $region28: #{tpu_custom_call.1} parent=11 // pred_fallthru
          _
      $region12: #{tpu_custom_call.1} parent=5 // pred_fallthru
        _
      %p193 = scmp.lt.s32.totalorder %s14, 2
      // Predicated region
      $region29: #{tpu_custom_call.1} parent=5 // pred_check
        %p194 = pneg %p193
      $region30: #{tpu_custom_call.1} parent=5 // pred_check_branch
        %196 = sbr.rel (%p194) target = $region32
      $region31: #{tpu_custom_call.1} parent=5 // pred_region
        // Predicated region
        $region33: #{tpu_custom_call.1} parent=31 // pred_check
          %p197 = pneg %p48
        $region34: #{tpu_custom_call.1} parent=31 // pred_check_branch
          %199 = sbr.rel (%p197) target = $region36
        $region35: #{tpu_custom_call.1} parent=31 // pred_region
          %s200 = smul.u32 2, %s22
          %p201 = scmp.lt.s32.totalorder %s21, 1
          %s202 = scalar_select %p201, %s21, 1
          %p203 = scmp.lt.s32.totalorder %s200, 1
          %s204 = scalar_select %p203, %s200, 1
          %s205 = smul.addr %s202, 2
          %s206 = sadd.s32 %s204, %s205
          %s207 = smul.addr %s206, 4
          %s208 = scalar_lea.vmem %s0, %s207
          %s209 = smul.u32 2, %s22
        $region36: #{tpu_custom_call.1} parent=31 // pred_fallthru
          _
      $region32: #{tpu_custom_call.1} parent=5 // pred_fallthru
        _
      %p210 = scmp.le.s32.totalorder 1, %s14
      %p211 = scmp.lt.s32.totalorder %s14, 3
      %p212 = pnand %p210, %p211
      %p213 = pneg %p212
      // Predicated region
      $region37: #{tpu_custom_call.1} parent=5 // pred_check
        _
      $region38: #{tpu_custom_call.1} parent=5 // pred_check_branch
        %215 = sbr.rel (%p212) target = $region40
      $region39: #{tpu_custom_call.1} parent=5 // pred_region
        %s216 = ssub.s32 %s14, 1
        %s217 = smul.u32 2, %s24
        %p218 = scmp.lt.s32.totalorder %s23, 1
        %s219 = scalar_select %p218, %s23, 1
        %p220 = scmp.lt.s32.totalorder %s217, 1
        %s221 = scalar_select %p220, %s217, 1
        %s222 = smul.addr %s219, 2
        %s223 = sadd.s32 %s221, %s222
        %s224 = smul.addr %s223, 4
        %s225 = scalar_lea.vmem %s0, %s224
        %p226 = pneg %p54
        %p227 = pneg %p51
        %p228 = pneg %p75
        %p229 = pneg %p72
        %p230 = pneg %p96
        %p231 = pneg %p93
        %p232 = pneg %p117
        %p233 = pneg %p114
        %p234 = pneg %p138
        %p235 = pneg %p135
        %p236 = pneg %p166
        %p237 = pneg %p163
        %s238 = sand.u32 %s153, 1
        %s239 = scalar_lea.sflag [#allocation3], %s238
        %s240 = sand.u32 %s153, 1
        %s241 = smul.addr %s240, 8
        %s242 = scalar_lea.vmem [#allocation2], %s241
        %s243 = smul.u32 2, %s24
        %p244 = scmp.lt.s32.totalorder %s23, 1
        %s245 = scalar_select %p244, %s23, 1
        %p246 = scmp.lt.s32.totalorder %s243, 1
        %s247 = scalar_select %p246, %s243, 1
        %s248 = smul.addr %s245, 2
        %s249 = sadd.s32 %s247, %s248
        %s250 = smul.addr %s249, 4
        %s251 = scalar_lea.vmem %s0, %s250
        %s252 = smul.u32 2, %s24
        %s253 = smul.u32 2, %s24
        %v255 = vld [vmem:[%s1] sm:$0xf]
        %v256 = vld [vmem:[%s1 + $0x4] sm:$0xf]
        %v257 = vld [vmem:[%s1 + $0x8] sm:$0xf]
        %v258 = vld [vmem:[%s1 + $0xc] sm:$0xf]
        %v259 = vld [vmem:[%s2] sm:$0xff]
        %v260 = vld [vmem:[%s2 + $0x8] sm:$0xff]
        %v261 = vld [vmem:[%s2 + $0x10] sm:$0xff]
        %v262 = vld [vmem:[%s2 + $0x18] sm:$0xff]
        %v263 = vld [vmem:[%s3] sm:$0x3]
        %v264 = vld [vmem:[%s4] sm:$0xf]
        %v265 = vld [vmem:[%s251] sm:$0xff]
        %267 = vst [vmem:[#allocation1] ss:$2 sm:$0xff] %v265
        %v268 = vld.sshfl [vmem:[#allocation1] sm:$0xff pattern:$0x75316420]
        %v269 = vld.sshfl [vmem:[#allocation1 + $0x8] sm:$0xff pattern:$0x75316420]
        %v272 = vpack.c.bf16 %v268, %v268
        %v273 = vpack.c.bf16 %v269, %v269
        %275 = vset.pattern.permute.xlu0 0
        %276 = vperm.xlu0 %275, %v259
        %v277 = vpop.permute.xlu0 %276
        %280 = vset.pattern.permute.xlu0 0
        %281 = vperm.xlu0 %280, %v260
        %v282 = vpop.permute.xlu0 %281
        %285 = vset.pattern.permute.xlu0 0
        %286 = vperm.xlu0 %285, %v261
        %v287 = vpop.permute.xlu0 %286
        %290 = vset.pattern.permute.xlu0 0
        %291 = vperm.xlu0 %290, %v262
        %v292 = vpop.permute.xlu0 %291
        %v298 = vunpack.c.l.b16 %v255
        %v299 = vunpack.c.l.b16 %v256
        %v300 = vunpack.c.l.b16 %v257
        %v301 = vunpack.c.l.b16 %v258
        %v302 = vpack.c.b16 %v299, %v298
        %v303 = vpack.c.b16 %v301, %v300
        %vm304 = vcmask 31744
        %v306 = vsel %vm304, %v302, 0
        %v309 = vsel %vm304, %v303, 0
        %vm311 = vcmask 1041408
        %v313 = vsel %vm311, %v272, 0
        %v316 = vsel %vm311, %v273, 0
        %318 = vmatpush.bf16.msra.mxu0 0
        %319 = vmatpush.bf16.msra.mxu0 0
        %320 = vmatpush.bf16.msra.mxu0 0
        %321 = vmatpush.bf16.msra.mxu0 0
        %322 = vmatpush.bf16.msra.mxu0 0
        %323 = vmatpush.bf16.msra.mxu0 0
        %324 = vmatpush.bf16.msra.mxu0 0
        %325 = vmatpush.bf16.msra.mxu0 %v313
        %326 = vmatmul.bf16.gmra.mxu0 %v306
        %v327 = vpop.f32.mrf.mxu0
        %v328 = vadd.f32 %v277, %v327
        %v329 = vpop.f32.mrf.mxu0
        %v330 = vadd.f32 %v282, %v329
        %331 = vmatmul.bf16.gmra.mxu0 %v309
        %v332 = vpop.f32.mrf.mxu0
        %v333 = vadd.f32 %v287, %v332
        %v334 = vpop.f32.mrf.mxu0
        %v335 = vadd.f32 %v292, %v334
        %336 = vdwg.mxu0
        %337 = vmatpush.bf16.msra.mxu0 0
        %338 = vmatpush.bf16.msra.mxu0 0
        %339 = vmatpush.bf16.msra.mxu0 0
        %340 = vmatpush.bf16.msra.mxu0 0
        %341 = vmatpush.bf16.msra.mxu0 0
        %342 = vmatpush.bf16.msra.mxu0 0
        %343 = vmatpush.bf16.msra.mxu0 0
        %344 = vmatpush.bf16.msra.mxu0 %v316
        %345 = vmatmul.bf16.gmra.mxu0 %v306
        %v346 = vpop.f32.mrf.mxu0
        %v347 = vadd.f32 %v277, %v346
        %v348 = vpop.f32.mrf.mxu0
        %v349 = vadd.f32 %v282, %v348
        %350 = vmatmul.bf16.gmra.mxu0 %v309
        %v351 = vpop.f32.mrf.mxu0
        %v352 = vadd.f32 %v287, %v351
        %v353 = vpop.f32.mrf.mxu0
        %v354 = vadd.f32 %v292, %v353
        %355 = vdwg.mxu0
        %v356 = vmax.f32 %v328, 0.0
        %v357 = vmax.f32 %v347, 0.0
        %v358 = vmax.f32 %v330, 0.0
        %v359 = vmax.f32 %v349, 0.0
        %v360 = vmax.f32 %v333, 0.0
        %v361 = vmax.f32 %v352, 0.0
        %v362 = vmax.f32 %v335, 0.0
        %v363 = vmax.f32 %v354, 0.0
        %v364 = vmin.f32 %v356, 6.0
        %v365 = vmin.f32 %v357, 6.0
        %v366 = vmin.f32 %v358, 6.0
        %v367 = vmin.f32 %v359, 6.0
        %v368 = vmin.f32 %v360, 6.0
        %v369 = vmin.f32 %v361, 6.0
        %v370 = vmin.f32 %v362, 6.0
        %v371 = vmin.f32 %v363, 6.0
        %v372 = vpack.c.bf16 %v366, %v364
        %v373 = vpack.c.bf16 %v367, %v365
        %v374 = vpack.c.bf16 %v370, %v368
        %v375 = vpack.c.bf16 %v371, %v369
        %377 = vset.pattern.permute.xlu0 0
        %378 = vperm.xlu0 %377, %v264
        %v379 = vpop.permute.xlu0 %378
        %vm381 = vcmask 261120
        %v383 = vsel %vm381, %v263, 0
        %385 = vmatpush.bf16.msra.mxu0 0
        %386 = vmatpush.bf16.msra.mxu0 0
        %387 = vmatpush.bf16.msra.mxu0 0
        %388 = vmatpush.bf16.msra.mxu0 0
        %389 = vmatpush.bf16.msra.mxu0 0
        %390 = vmatpush.bf16.msra.mxu0 0
        %391 = vmatpush.bf16.msra.mxu0 %v374
        %392 = vmatpush.bf16.msra.mxu0 %v372
        %393 = vmatmul.bf16.gmra.mxu0 %v383
        %v394 = vpop.f32.mrf.mxu0
        %v395 = vadd.f32 %v379, %v394
        %v396 = vpop.f32.mrf.mxu0
        %397 = vdwg.mxu0
        %398 = vmatpush.bf16.msra.mxu0 0
        %399 = vmatpush.bf16.msra.mxu0 0
        %400 = vmatpush.bf16.msra.mxu0 0
        %401 = vmatpush.bf16.msra.mxu0 0
        %402 = vmatpush.bf16.msra.mxu0 0
        %403 = vmatpush.bf16.msra.mxu0 0
        %404 = vmatpush.bf16.msra.mxu0 %v375
        %405 = vmatpush.bf16.msra.mxu0 %v373
        %406 = vmatmul.bf16.gmra.mxu0 %v383
        %v407 = vpop.f32.mrf.mxu0
        %v408 = vadd.f32 %v379, %v407
        %v409 = vpop.f32.mrf.mxu0
        %410 = vdwg.mxu0
        %v413 = vrot.slane %v408, 4
        %vm414 = vcmask 1043456
        %v415 = vsel %vm414, %v395, %v413
        %417 = vst [vmem:[%s242] sm:$0xff] %v415
        %s418 = sand.u32 %s153, 1
        %s419 = scalar_lea.sflag [#allocation3], %s418
        %s420 = sand.u32 %s153, 1
        %s421 = smul.addr %s420, 8
        %s422 = scalar_lea.vmem [#allocation2], %s421
        // Predicated region
        $region41: #{tpu_custom_call.1} parent=39 // pred_check
          %p423 = pneg %p163
        $region42: #{tpu_custom_call.1} parent=39 // pred_check_branch
          %425 = sbr.rel (%p423) target = $region44
        $region43: #{tpu_custom_call.1} parent=39 // pred_region
          %s426 = smul.u32 2, %s24
          %428 = vsyncadd %s419, 0
          %s429 = smul.addr %s23, 2
          %s430 = sadd.s32 %s426, %s429
          %s431 = smul.addr %s430, 4
          %s432 = scalar_lea.hbm %s5, %s431
          %s434 = sshll.u32 %s422, 4
          %s435 = int_to_ptr.vmem [resolvable:$true] %s434
          %s436 = sshll.u32 %s432, 4
          %s437 = int_to_ptr.hbm [resolvable:$true] %s436
          %439 = dma.vmem_to_hbm [thread:$0]  %s435, 128, %s437, %s419
        $region44: #{tpu_custom_call.1} parent=39 // pred_fallthru
          _
      $region40: #{tpu_custom_call.1} parent=5 // pred_fallthru
        _
      %p440 = scmp.le.s32.totalorder 2, %s14
      // Predicated region
      $region45: #{tpu_custom_call.1} parent=5 // pred_check
        %p441 = pneg %p440
      $region46: #{tpu_custom_call.1} parent=5 // pred_check_branch
        %443 = sbr.rel (%p441) target = $region48
      $region47: #{tpu_custom_call.1} parent=5 // pred_region
        %s444 = ssub.s32 %s14, 2
        // Predicated region
        $region49: #{tpu_custom_call.1} parent=47 // pred_check
          %p445 = pneg %p169
        $region50: #{tpu_custom_call.1} parent=47 // pred_check_branch
          %447 = sbr.rel (%p445) target = $region52
        $region51: #{tpu_custom_call.1} parent=47 // pred_region
          %s448 = sand.u32 %s154, 1
          %s449 = scalar_lea.sflag [#allocation3], %s448
          %s450 = sand.u32 %s154, 1
          %s451 = smul.addr %s450, 8
          %s452 = scalar_lea.vmem [#allocation2], %s451
          %454 = dma.done %s449, 128
        $region52: #{tpu_custom_call.1} parent=47 // pred_fallthru
          _
      $region48: #{tpu_custom_call.1} parent=5 // pred_fallthru
        _
    $region6: #{tpu_custom_call.1} parent=1 // loop_footer
      %s18 = sadd.s32 1, %s14
    $region7: #{tpu_custom_call.1} parent=1 // loop_footer_branch
      %13 = sbr.rel target = $region3
    $region8: #{tpu_custom_call.1} parent=1 // loop_exit
      _
    %455 = vsyncpa [#allocation3], 1
    %s456 = scalar_lea.sflag [#allocation3], 1
    %457 = vsyncpa %s456, 1

</llo_original>
